<compile_context>
chip_gen: v6e
topology: v6e:2x2x1
jax: 0.10.0
libtpu: 0.0.40
codegen_flags: <defaults>
</compile_context>

<pallas_src>
import numpy as np
import jax
import jax.numpy as jnp
from jax import lax
from jax.experimental import pallas as pl
from jax.experimental.pallas import tpu as pltpu

# ----- static problem sizes (consistent with the module's docstrings) -----
H = W = 10                     # view spatial size
CIN = 5                        # view channels
C1 = 32                        # conv1 out channels
C2 = 32                        # conv2 out channels
K = 3                          # kernel size
S = 2                          # stride
OH1 = OW1 = (H - K) // S + 1   # 4
OH2 = OW2 = (OH1 - K) // S + 1 # 1
FLAT = C2 * OH2 * OW2          # 32 == actual in_size of linear1
HIDDEN = 128
ACTION_DIM = 8

IN_FLAT = H * W * CIN          # 500  (flattened NHWC input per sample)
H1_FLAT = OH1 * OW1 * C1       # 512  (flattened conv1 output per sample)
SLAB_W = max(H1_FLAT, HIDDEN)  # 512  (lane-dense packed-parameter slab width)
OUT_PAD = HIDDEN               # 128  (lane-dense padded logits width)

TB_MAX = 256                   # batch-tile rows (fills v6e/v7x MXU; fine on v5e)


def _a8(n):
    return (n + 7) // 8 * 8


# packed-parameter slab row offsets (all 8-row aligned -> clean sublane tiles)
R_W1E = 0                        # conv1 effective weight  [500, 512]
R_W2P = _a8(R_W1E + IN_FLAT)     # conv2 padded weight     [512, 32]
R_WL1 = _a8(R_W2P + H1_FLAT)     # linear1 weight          [32, 128]
R_WL2 = _a8(R_WL1 + FLAT)        # linear2 weight          [128, 128]
R_WL3 = _a8(R_WL2 + HIDDEN)      # linear3 weight (padded) [128, 128]
R_B1 = _a8(R_WL3 + HIDDEN)       # conv1 bias tiled        [1, 512]
R_B2 = R_B1 + 8                  # conv2 bias              [1, 32]
R_BL1 = R_B2 + 8                 # linear1 bias            [1, 128]
R_BL2 = R_BL1 + 8                # linear2 bias            [1, 128]
R_BL3 = R_BL2 + 8                # linear3 bias (padded)   [1, 128]
SLAB_ROWS = R_BL3 + 8            # 1344


def actor_kernel(x_ref, p_ref, o_ref):
    """One batch tile: x_ref [TB, 500] (flattened NHWC view), p_ref packed params,
    o_ref [TB, 128] lane-padded logits (cols >= ACTION_DIM are zero).
    Five f32 MXU matmuls, no in-kernel reshapes or lane slices."""
    f32 = jnp.float32
    x = x_ref[...]

    w1e = p_ref[R_W1E:R_W1E + IN_FLAT, 0:H1_FLAT]     # [500, 512]
    b1t = p_ref[R_B1:R_B1 + 1, 0:H1_FLAT]             # [1, 512]
    w2p = p_ref[R_W2P:R_W2P + H1_FLAT, 0:C2]          # [512, 32]
    b2 = p_ref[R_B2:R_B2 + 1, 0:C2]                   # [1, 32]
    wl1 = p_ref[R_WL1:R_WL1 + FLAT, 0:HIDDEN]         # [32, 128]
    bl1 = p_ref[R_BL1:R_BL1 + 1, 0:HIDDEN]            # [1, 128]
    wl2 = p_ref[R_WL2:R_WL2 + HIDDEN, 0:HIDDEN]       # [128, 128]
    bl2 = p_ref[R_BL2:R_BL2 + 1, 0:HIDDEN]            # [1, 128]
    wl3 = p_ref[R_WL3:R_WL3 + HIDDEN, 0:HIDDEN]       # [128, 128] (cols 8.. are zero)
    bl3 = p_ref[R_BL3:R_BL3 + 1, 0:HIDDEN]            # [1, 128]   (cols 8.. are zero)

    # conv1 + ReLU (im2col folded into w1e at init)
    h1 = jnp.maximum(jnp.dot(x, w1e, preferred_element_type=f32) + b1t, 0.0)   # [TB,512]
    # conv2 + ReLU (zero-padded weight)  == Flatten() output
    h2 = jnp.maximum(jnp.dot(h1, w2p, preferred_element_type=f32) + b2, 0.0)   # [TB,32]
    # MLP: relu(l1) -> relu(l2) -> l3 (logits, lane-padded to 128)
    y = jnp.maximum(jnp.dot(h2, wl1, preferred_element_type=f32) + bl1, 0.0)   # [TB,128]
    y = jnp.maximum(jnp.dot(y, wl2, preferred_element_type=f32) + bl2, 0.0)    # [TB,128]
    o_ref[...] = jnp.dot(y, wl3, preferred_element_type=f32) + bl3             # [TB,128]


@jax.jit
def actor_forward(view_state, packed):
    """view_state: [B, 10, 10, 5] NHWC; packed: [SLAB_ROWS, SLAB_W] parameter slab.
    Returns logits [B, ACTION_DIM]."""
    bsz = view_state.shape[0]
    x2d = view_state.reshape(bsz, IN_FLAT)             # free contiguous flatten
    tb = min(TB_MAX, bsz)
    grid = (pl.cdiv(bsz, tb),)
    padded_logits = pl.pallas_call(
        actor_kernel,
        out_shape=jax.ShapeDtypeStruct((bsz, OUT_PAD), jnp.float32),
        grid=grid,
        in_specs=[
            pl.BlockSpec((tb, IN_FLAT), lambda i: (i, 0)),
            pl.BlockSpec((SLAB_ROWS, SLAB_W), lambda i: (0, 0)),   # resident across grid
        ],
        out_specs=pl.BlockSpec((tb, OUT_PAD), lambda i: (i, 0)),   # lane-dense stores
        compiler_params=pltpu.CompilerParams(
            dimension_semantics=("parallel",)),        # shards across TCs on v7x
    )(x2d, packed)
    return padded_logits[:, :ACTION_DIM]


# ----- deterministic parameter initialization (mirrors weights_init_xavier) -----
def _xavier_uniform(key, shape):
    fan_in, fan_out = shape
    limit = (6.0 / (fan_in + fan_out)) ** 0.5
    return jax.random.uniform(key, shape, jnp.float32, -limit, limit)


def init_params(key):
    ks = jax.random.split(key, 7)
    # conv weights (HWIO); conv biases small uniform (weights_init_xavier only
    # re-inits nn.Linear, so conv init is an arbitrary deterministic choice here)
    w1 = jax.random.uniform(ks[0], (K, K, CIN, C1), jnp.float32, -0.1, 0.1)
    b1 = jax.random.uniform(ks[1], (C1,), jnp.float32, -0.05, 0.05)
    w2 = jax.random.uniform(ks[2], (K, K, C1, C2), jnp.float32, -0.05, 0.05)
    b2 = jax.random.uniform(ks[3], (C2,), jnp.float32, -0.05, 0.05)
    # linear layers: xavier_uniform weights (gain=1), zero biases
    wl1 = _xavier_uniform(ks[4], (FLAT, HIDDEN))
    wl2 = _xavier_uniform(ks[5], (HIDDEN, HIDDEN))
    wl3 = _xavier_uniform(ks[6], (HIDDEN, ACTION_DIM))
    return {
        "w1": w1, "b1": b1, "w2": w2, "b2": b2,
        "wl1": wl1, "bl1": jnp.zeros((HIDDEN,), jnp.float32),
        "wl2": wl2, "bl2": jnp.zeros((HIDDEN,), jnp.float32),
        "wl3": wl3, "bl3": jnp.zeros((ACTION_DIM,), jnp.float32),
    }


def pack_params(params):
    """Pack all params into one lane-dense f32 slab; pre-lower conv1/conv2 to matmuls.
    Host-side, runs once at init."""
    f32 = np.float32
    w1 = np.asarray(params["w1"], f32)   # [3,3,5,32]  HWIO
    w2 = np.asarray(params["w2"], f32)   # [3,3,32,32] HWIO

    # conv1 (stride 2, VALID) as one dense matmul: flat NHWC [500] -> flat conv1 [512]
    # w1e[(h*W+w)*CIN+cin, (oh*OW1+ow)*C1+c] = w1[h-2*oh, w-2*ow, cin, c]
    w1e = np.zeros((IN_FLAT, H1_FLAT), f32)
    for oh in range(OH1):
        for ow in range(OW1):
            p = oh * OW1 + ow
            for kh in range(K):
                for kw in range(K):
                    r0 = ((S * oh + kh) * W + (S * ow + kw)) * CIN
                    w1e[r0:r0 + CIN, p * C1:(p + 1) * C1] = w1[kh, kw]

    # conv2 (4x4 -> 1x1) as one dense matmul with zero rows at unused spatial positions
    w2p = np.zeros((H1_FLAT, C2), f32)
    for kh in range(K):
        for kw in range(K):
            p = kh * OW1 + kw
            w2p[p * C1:(p + 1) * C1, :] = w2[kh, kw]

    slab = np.zeros((SLAB_ROWS, SLAB_W), f32)
    slab[R_W1E:R_W1E + IN_FLAT, :H1_FLAT] = w1e
    slab[R_W2P:R_W2P + H1_FLAT, :C2] = w2p
    slab[R_WL1:R_WL1 + FLAT, :HIDDEN] = np.asarray(params["wl1"], f32)
    slab[R_WL2:R_WL2 + HIDDEN, :HIDDEN] = np.asarray(params["wl2"], f32)
    slab[R_WL3:R_WL3 + HIDDEN, :ACTION_DIM] = np.asarray(params["wl3"], f32)
    slab[R_B1, :H1_FLAT] = np.tile(np.asarray(params["b1"], f32), OH1 * OW1)
    slab[R_B2, :C2] = np.asarray(params["b2"], f32)
    slab[R_BL1, :HIDDEN] = np.asarray(params["bl1"], f32)
    slab[R_BL2, :HIDDEN] = np.asarray(params["bl2"], f32)
    slab[R_BL3, :ACTION_DIM] = np.asarray(params["bl3"], f32)
    return jnp.asarray(slab)


# ----- plain-JAX reference (lax.conv) for correctness checking -----
def reference_forward(x, params):
    dn = ("NHWC", "HWIO", "NHWC")
    hp = lax.Precision.HIGHEST
    h1 = lax.conv_general_dilated(x, params["w1"], (S, S), "VALID",
                                  dimension_numbers=dn, precision=hp)
    h1 = jnp.maximum(h1 + params["b1"].reshape(1, 1, 1, C1), 0.0)
    h2 = lax.conv_general_dilated(h1, params["w2"], (S, S), "VALID",
                                  dimension_numbers=dn, precision=hp)
    h2 = jnp.maximum(h2 + params["b2"].reshape(1, 1, 1, C2), 0.0)
    flat = h2.reshape(x.shape[0], -1)                  # [B, 32]
    y = jnp.maximum(jnp.dot(flat, params["wl1"], precision=hp) + params["bl1"], 0.0)
    y = jnp.maximum(jnp.dot(y, params["wl2"], precision=hp) + params["bl2"], 0.0)
    return jnp.dot(y, params["wl3"], precision=hp) + params["bl3"]


if __name__ == "__main__":
    key = jax.random.PRNGKey(0)
    pkey, xkey = jax.random.split(key)
    params = init_params(pkey)
    packed = pack_params(params)

    B = 2
    # view_state: [batch, 10, 10, 5] per the CNN_encoder docstring
    view_state = jax.random.normal(xkey, (B, H, W, CIN), jnp.float32)

    logits = actor_forward(view_state, packed)
    logits = jax.block_until_ready(logits)

    ref = reference_forward(view_state, params)
    assert logits.shape == (B, ACTION_DIM)
    assert jnp.allclose(logits, ref, atol=1e-3, rtol=1e-3), (logits, ref)
    print("KERNEL_OK")
</pallas_src>

<mosaic_0001>
module attributes {stable_mosaic.version = 11 : i64} {
  func.func @actor_kernel(%arg0: i32, %arg1: memref<2x500xf32, #tpu.memory_space<vmem>>, %arg2: memref<1344x512xf32, #tpu.memory_space<vmem>>, %arg3: memref<2x128xf32, #tpu.memory_space<vmem>>) attributes {dimension_semantics = [#tpu.dimension_semantics<parallel>], iteration_bounds = array<i64: 1>, scalar_prefetch = 0 : i64, scratch_operands = 0 : i64, tpu.core_type = #tpu.core_type<tc>, window_params = [{transform_indices = @transform_0, window_bounds = array<i64: 2, 500>}, {pipeline_mode = #tpu.pipeline_mode<synchronous>, transform_indices = @transform_1, window_bounds = array<i64: 1344, 512>}, {transform_indices = @transform_2, window_bounds = array<i64: 2, 128>}]} {
    %c0 = arith.constant 0 : index
    %c0_0 = arith.constant 0 : index
    %0 = vector.load %arg1[%c0, %c0_0] : memref<2x500xf32, #tpu.memory_space<vmem>>, vector<2x500xf32>
    %c0_1 = arith.constant 0 : index
    %c0_2 = arith.constant 0 : index
    %1 = vector.load %arg2[%c0_1, %c0_2] : memref<1344x512xf32, #tpu.memory_space<vmem>>, vector<500x512xf32>
    %c1304 = arith.constant 1304 : index
    %c0_3 = arith.constant 0 : index
    %2 = vector.load %arg2[%c1304, %c0_3] : memref<1344x512xf32, #tpu.memory_space<vmem>>, vector<1x512xf32>
    %c504 = arith.constant 504 : index
    %c0_4 = arith.constant 0 : index
    %3 = vector.load %arg2[%c504, %c0_4] : memref<1344x512xf32, #tpu.memory_space<vmem>>, vector<512x32xf32>
    %c1312 = arith.constant 1312 : index
    %c0_5 = arith.constant 0 : index
    %4 = vector.load %arg2[%c1312, %c0_5] : memref<1344x512xf32, #tpu.memory_space<vmem>>, vector<1x32xf32>
    %c1016 = arith.constant 1016 : index
    %c0_6 = arith.constant 0 : index
    %5 = vector.load %arg2[%c1016, %c0_6] : memref<1344x512xf32, #tpu.memory_space<vmem>>, vector<32x128xf32>
    %c1320 = arith.constant 1320 : index
    %c0_7 = arith.constant 0 : index
    %6 = vector.load %arg2[%c1320, %c0_7] : memref<1344x512xf32, #tpu.memory_space<vmem>>, vector<1x128xf32>
    %c1048 = arith.constant 1048 : index
    %c0_8 = arith.constant 0 : index
    %7 = vector.load %arg2[%c1048, %c0_8] : memref<1344x512xf32, #tpu.memory_space<vmem>>, vector<128x128xf32>
    %c1328 = arith.constant 1328 : index
    %c0_9 = arith.constant 0 : index
    %8 = vector.load %arg2[%c1328, %c0_9] : memref<1344x512xf32, #tpu.memory_space<vmem>>, vector<1x128xf32>
    %c1176 = arith.constant 1176 : index
    %c0_10 = arith.constant 0 : index
    %9 = vector.load %arg2[%c1176, %c0_10] : memref<1344x512xf32, #tpu.memory_space<vmem>>, vector<128x128xf32>
    %c1336 = arith.constant 1336 : index
    %c0_11 = arith.constant 0 : index
    %10 = vector.load %arg2[%c1336, %c0_11] : memref<1344x512xf32, #tpu.memory_space<vmem>>, vector<1x128xf32>
    %cst = arith.constant dense<0.000000e+00> : vector<2x512xf32>
    %11 = tpu.matmul %0, %1, %cst {dimension_numbers = #tpu.dot_dimension_numbers<[1], [0], [0], [1], [0, 0, 1, 1], [], []>} : vector<2x500xf32>, vector<500x512xf32>, vector<2x512xf32> -> vector<2x512xf32>
    %12 = vector.broadcast %2 : vector<1x512xf32> to vector<2x512xf32>
    %13 = arith.addf %11, %12 : vector<2x512xf32>
    %cst_12 = arith.constant 0.000000e+00 : f32
    %14 = vector.broadcast %cst_12 : f32 to vector<2x512xf32>
    %15 = arith.maximumf %13, %14 : vector<2x512xf32>
    %cst_13 = arith.constant dense<0.000000e+00> : vector<2x32xf32>
    %16 = tpu.matmul %15, %3, %cst_13 {dimension_numbers = #tpu.dot_dimension_numbers<[1], [0], [0], [1], [0, 0, 1, 1], [], []>} : vector<2x512xf32>, vector<512x32xf32>, vector<2x32xf32> -> vector<2x32xf32>
    %17 = vector.broadcast %4 : vector<1x32xf32> to vector<2x32xf32>
    %18 = arith.addf %16, %17 : vector<2x32xf32>
    %cst_14 = arith.constant 0.000000e+00 : f32
    %19 = vector.broadcast %cst_14 : f32 to vector<2x32xf32>
    %20 = arith.maximumf %18, %19 : vector<2x32xf32>
    %cst_15 = arith.constant dense<0.000000e+00> : vector<2x128xf32>
    %21 = tpu.matmul %20, %5, %cst_15 {dimension_numbers = #tpu.dot_dimension_numbers<[1], [0], [0], [1], [0, 0, 1, 1], [], []>} : vector<2x32xf32>, vector<32x128xf32>, vector<2x128xf32> -> vector<2x128xf32>
    %22 = vector.broadcast %6 : vector<1x128xf32> to vector<2x128xf32>
    %23 = arith.addf %21, %22 : vector<2x128xf32>
    %cst_16 = arith.constant 0.000000e+00 : f32
    %24 = vector.broadcast %cst_16 : f32 to vector<2x128xf32>
    %25 = arith.maximumf %23, %24 : vector<2x128xf32>
    %cst_17 = arith.constant dense<0.000000e+00> : vector<2x128xf32>
    %26 = tpu.matmul %25, %7, %cst_17 {dimension_numbers = #tpu.dot_dimension_numbers<[1], [0], [0], [1], [0, 0, 1, 1], [], []>} : vector<2x128xf32>, vector<128x128xf32>, vector<2x128xf32> -> vector<2x128xf32>
    %27 = vector.broadcast %8 : vector<1x128xf32> to vector<2x128xf32>
    %28 = arith.addf %26, %27 : vector<2x128xf32>
    %cst_18 = arith.constant 0.000000e+00 : f32
    %29 = vector.broadcast %cst_18 : f32 to vector<2x128xf32>
    %30 = arith.maximumf %28, %29 : vector<2x128xf32>
    %cst_19 = arith.constant dense<0.000000e+00> : vector<2x128xf32>
    %31 = tpu.matmul %30, %9, %cst_19 {dimension_numbers = #tpu.dot_dimension_numbers<[1], [0], [0], [1], [0, 0, 1, 1], [], []>} : vector<2x128xf32>, vector<128x128xf32>, vector<2x128xf32> -> vector<2x128xf32>
    %32 = vector.broadcast %10 : vector<1x128xf32> to vector<2x128xf32>
    %33 = arith.addf %31, %32 : vector<2x128xf32>
    %c0_20 = arith.constant 0 : index
    %c0_21 = arith.constant 0 : index
    %34 = vector.load %arg3[%c0_20, %c0_21] : memref<2x128xf32, #tpu.memory_space<vmem>>, vector<2x128xf32>
    tpu.vector_store %arg3[%c0_20, %c0_21], %33 {strides = array<i32>} : memref<2x128xf32, #tpu.memory_space<vmem>>, vector<2x128xf32>,
    return
  }
  func.func @transform_0(%arg0: i32) -> (i32, i32) {
    %c0_i32 = arith.constant 0 : i32
    %c0_i32_0 = arith.constant 0 : i32
    return %arg0, %c0_i32 : i32, i32
  }
  func.func @transform_1(%arg0: i32) -> (i32, i32) {
    %c0_i32 = arith.constant 0 : i32
    %c0_i32_0 = arith.constant 0 : i32
    %c0_i32_1 = arith.constant 0 : i32
    return %c0_i32, %c0_i32_0 : i32, i32
  }
  func.func @transform_2(%arg0: i32) -> (i32, i32) {
    %c0_i32 = arith.constant 0 : i32
    %c0_i32_0 = arith.constant 0 : i32
    return %arg0, %c0_i32 : i32, i32
  }
}

</mosaic_0001>

<llo_original>
// kernel: actor_forward.1
$region0: #{actor_forward.1}
  #allocation0 [shape = 'u32[]', space=smem, size = 0x4, offset = 0x4, fixed_abs, tag = 'smem constant byte address 0x4 - core index']
  #allocation1 [shape = 'u32[144,128]{1,0:T(1,128)}', space=vmem, size = 0x12000, scoped, tag = 'internal scratch']
  %s0 = inlined_call_operand.vmem [shape: f32[2,500], index: 0, kind: input, shape index: {}]
  %s1 = inlined_call_operand.hbm [shape: f32[1344,512], index: 1, kind: input, shape index: {}]
  %s2 = inlined_call_operand.hbm [shape: f32[2,128], index: 2, kind: output, shape index: {}]
  %s3 = sld [smem:[#allocation0]]
  $region22: #{actor_forward.1} parent=0
    _
  %s5 = ssub.s32 1, %s3
  %s6 = scalar_select 0, %s5, %s3
  $region1: #{actor_forward.1} parent=0
    #allocation2 [shape = 'u8[2752512]{0}', space=vmem, size = 0x2a0000, scoped, tag = 'input window, operand 1, single buffered']
    #allocation3 [shape = 's32[1]{0}', space=sflag, size = 0x4, scoped, tag = 'scoped memory for actor_forward.1']
    #allocation4 [shape = 's32[1]{0}', space=sflag, size = 0x4, scoped, tag = 'scoped memory for actor_forward.1']
    #allocation5 [shape = 'u8[1024]{0}', space=vmem, size = 0x400, scoped, tag = 'output window, operand 0, single buffered']
    %7 = vsyncpa [#allocation3], 0
    %8 = vsyncpa [#allocation4], 0
    // Predicated region
    $region2: #{actor_forward.1} parent=1 // pred_check
      _
    $region3: #{actor_forward.1} parent=1 // pred_check_branch
      %10 = sbr.rel (0) target = $region5
    $region4: #{actor_forward.1} parent=1 // pred_region
      _
    $region5: #{actor_forward.1} parent=1 // pred_fallthru
      _
    // Predicated region
    $region6: #{actor_forward.1} parent=1 // pred_check
      _
    $region7: #{actor_forward.1} parent=1 // pred_check_branch
      %12 = sbr.rel (0) target = $region9
    $region8: #{actor_forward.1} parent=1 // pred_region
      %s14 = ssub.s32 86016, 86016
      %15 = vsyncadd [#allocation3], %s14
      %s16 = sshll.u32 [#allocation2], 4
      %s17 = int_to_ptr.vmem [resolvable:$true] %s16
      %22 = dma.hbm_to_vmem [thread:$0]  %s1, 86016, %s17, [#allocation3], 512, 512, 32
    $region9: #{actor_forward.1} parent=1 // pred_fallthru
      _
    // Predicated region
    $region10: #{actor_forward.1} parent=1 // pred_check
      _
    $region11: #{actor_forward.1} parent=1 // pred_check_branch
      %24 = sbr.rel (0) target = $region13
    $region12: #{actor_forward.1} parent=1 // pred_region
      %25 = dma.done [#allocation3], 86016
    $region13: #{actor_forward.1} parent=1 // pred_fallthru
      _
    %v26 = vld [vmem:[%s0] sm:$0xff]
    %v27 = vld [vmem:[#allocation2] sm:$0xff]
    %v28 = vld [vmem:[#allocation2 + $0x8] sm:$0xff]
    %v29 = vld [vmem:[#allocation2 + $0x10] sm:$0xff]
    %v30 = vld [vmem:[#allocation2 + $0x18] sm:$0xff]
    %v31 = vld [vmem:[#allocation2 + $0x20] sm:$0xff]
    %v32 = vld [vmem:[#allocation2 + $0x28] sm:$0xff]
    %v33 = vld [vmem:[#allocation2 + $0x30] sm:$0xff]
    %v34 = vld [vmem:[#allocation2 + $0x38] sm:$0xff]
    %v35 = vld [vmem:[#allocation2 + $0x40] sm:$0xff]
    %v36 = vld [vmem:[#allocation2 + $0x48] sm:$0xff]
    %v37 = vld [vmem:[#allocation2 + $0x50] sm:$0xff]
    %v38 = vld [vmem:[#allocation2 + $0x58] sm:$0xff]
    %v39 = vld [vmem:[#allocation2 + $0x60] sm:$0xff]
    %v40 = vld [vmem:[#allocation2 + $0x68] sm:$0xff]
    %v41 = vld [vmem:[#allocation2 + $0x70] sm:$0xff]
    %v42 = vld [vmem:[#allocation2 + $0x78] sm:$0xff]
    %v43 = vld [vmem:[#allocation2 + $0x80] sm:$0xff]
    %v44 = vld [vmem:[#allocation2 + $0x88] sm:$0xff]
    %v45 = vld [vmem:[#allocation2 + $0x90] sm:$0xff]
    %v46 = vld [vmem:[#allocation2 + $0x98] sm:$0xff]
    %v47 = vld [vmem:[#allocation2 + $0xa0] sm:$0xff]
    %v48 = vld [vmem:[#allocation2 + $0xa8] sm:$0xff]
    %v49 = vld [vmem:[#allocation2 + $0xb0] sm:$0xff]
    %v50 = vld [vmem:[#allocation2 + $0xb8] sm:$0xff]
    %v51 = vld [vmem:[#allocation2 + $0xc0] sm:$0xff]
    %v52 = vld [vmem:[#allocation2 + $0xc8] sm:$0xff]
    %v53 = vld [vmem:[#allocation2 + $0xd0] sm:$0xff]
    %v54 = vld [vmem:[#allocation2 + $0xd8] sm:$0xff]
    %v55 = vld [vmem:[#allocation2 + $0xe0] sm:$0xff]
    %v56 = vld [vmem:[#allocation2 + $0xe8] sm:$0xff]
    %v57 = vld [vmem:[#allocation2 + $0xf0] sm:$0xff]
    %v58 = vld [vmem:[#allocation2 + $0xf8] sm:$0xff]
    %v59 = vld [vmem:[#allocation2 + $0x100] sm:$0xff]
    %v60 = vld [vmem:[#allocation2 + $0x108] sm:$0xff]
    %v61 = vld [vmem:[#allocation2 + $0x110] sm:$0xff]
    %v62 = vld [vmem:[#allocation2 + $0x118] sm:$0xff]
    %v63 = vld [vmem:[#allocation2 + $0x120] sm:$0xff]
    %v64 = vld [vmem:[#allocation2 + $0x128] sm:$0xff]
    %v65 = vld [vmem:[#allocation2 + $0x130] sm:$0xff]
    %v66 = vld [vmem:[#allocation2 + $0x138] sm:$0xff]
    %v67 = vld [vmem:[#allocation2 + $0x140] sm:$0xff]
    %v68 = vld [vmem:[#allocation2 + $0x148] sm:$0xff]
    %v69 = vld [vmem:[#allocation2 + $0x150] sm:$0xff]
    %v70 = vld [vmem:[#allocation2 + $0x158] sm:$0xff]
    %v71 = vld [vmem:[#allocation2 + $0x160] sm:$0xff]
    %v72 = vld [vmem:[#allocation2 + $0x168] sm:$0xff]
    %v73 = vld [vmem:[#allocation2 + $0x170] sm:$0xff]
    %v74 = vld [vmem:[#allocation2 + $0x178] sm:$0xff]
    %v75 = vld [vmem:[#allocation2 + $0x180] sm:$0xff]
    %v76 = vld [vmem:[#allocation2 + $0x188] sm:$0xff]
    %v77 = vld [vmem:[#allocation2 + $0x190] sm:$0xff]
    %v78 = vld [vmem:[#allocation2 + $0x198] sm:$0xff]
    %v79 = vld [vmem:[#allocation2 + $0x1a0] sm:$0xff]
    %v80 = vld [vmem:[#allocation2 + $0x1a8] sm:$0xff]
    %v81 = vld [vmem:[#allocation2 + $0x1b0] sm:$0xff]
    %v82 = vld [vmem:[#allocation2 + $0x1b8] sm:$0xff]
    %v83 = vld [vmem:[#allocation2 + $0x1c0] sm:$0xff]
    %v84 = vld [vmem:[#allocation2 + $0x1c8] sm:$0xff]
    %v85 = vld [vmem:[#allocation2 + $0x1d0] sm:$0xff]
    %v86 = vld [vmem:[#allocation2 + $0x1d8] sm:$0xff]
    %v87 = vld [vmem:[#allocation2 + $0x1e0] sm:$0xff]
    %v88 = vld [vmem:[#allocation2 + $0x1e8] sm:$0xff]
    %v89 = vld [vmem:[#allocation2 + $0x1f0] sm:$0xff]
    %v90 = vld [vmem:[#allocation2 + $0x1f8] sm:$0xff]
    %v91 = vld [vmem:[#allocation2 + $0x200] sm:$0xff]
    %v92 = vld [vmem:[#allocation2 + $0x208] sm:$0xff]
    %v93 = vld [vmem:[#allocation2 + $0x210] sm:$0xff]
    %v94 = vld [vmem:[#allocation2 + $0x218] sm:$0xff]
    %v95 = vld [vmem:[#allocation2 + $0x220] sm:$0xff]
    %v96 = vld [vmem:[#allocation2 + $0x228] sm:$0xff]
    %v97 = vld [vmem:[#allocation2 + $0x230] sm:$0xff]
    %v98 = vld [vmem:[#allocation2 + $0x238] sm:$0xff]
    %v99 = vld [vmem:[#allocation2 + $0x240] sm:$0xff]
    %v100 = vld [vmem:[#allocation2 + $0x248] sm:$0xff]
    %v101 = vld [vmem:[#allocation2 + $0x250] sm:$0xff]
    %v102 = vld [vmem:[#allocation2 + $0x258] sm:$0xff]
    %v103 = vld [vmem:[#allocation2 + $0x260] sm:$0xff]
    %v104 = vld [vmem:[#allocation2 + $0x268] sm:$0xff]
    %v105 = vld [vmem:[#allocation2 + $0x270] sm:$0xff]
    %v106 = vld [vmem:[#allocation2 + $0x278] sm:$0xff]
    %v107 = vld [vmem:[#allocation2 + $0x280] sm:$0xff]
    %v108 = vld [vmem:[#allocation2 + $0x288] sm:$0xff]
    %v109 = vld [vmem:[#allocation2 + $0x290] sm:$0xff]
    %v110 = vld [vmem:[#allocation2 + $0x298] sm:$0xff]
    %v111 = vld [vmem:[#allocation2 + $0x2a0] sm:$0xff]
    %v112 = vld [vmem:[#allocation2 + $0x2a8] sm:$0xff]
    %v113 = vld [vmem:[#allocation2 + $0x2b0] sm:$0xff]
    %v114 = vld [vmem:[#allocation2 + $0x2b8] sm:$0xff]
    %v115 = vld [vmem:[#allocation2 + $0x2c0] sm:$0xff]
    %v116 = vld [vmem:[#allocation2 + $0x2c8] sm:$0xff]
    %v117 = vld [vmem:[#allocation2 + $0x2d0] sm:$0xff]
    %v118 = vld [vmem:[#allocation2 + $0x2d8] sm:$0xff]
    %v119 = vld [vmem:[#allocation2 + $0x2e0] sm:$0xff]
    %v120 = vld [vmem:[#allocation2 + $0x2e8] sm:$0xff]
    %v121 = vld [vmem:[#allocation2 + $0x2f0] sm:$0xff]
    %v122 = vld [vmem:[#allocation2 + $0x2f8] sm:$0xff]
    %v123 = vld [vmem:[#allocation2 + $0x300] sm:$0xff]
    %v124 = vld [vmem:[#allocation2 + $0x308] sm:$0xff]
    %v125 = vld [vmem:[#allocation2 + $0x310] sm:$0xff]
    %v126 = vld [vmem:[#allocation2 + $0x318] sm:$0xff]
    %v127 = vld [vmem:[#allocation2 + $0x320] sm:$0xff]
    %v128 = vld [vmem:[#allocation2 + $0x328] sm:$0xff]
    %v129 = vld [vmem:[#allocation2 + $0x330] sm:$0xff]
    %v130 = vld [vmem:[#allocation2 + $0x338] sm:$0xff]
    %v131 = vld [vmem:[#allocation2 + $0x340] sm:$0xff]
    %v132 = vld [vmem:[#allocation2 + $0x348] sm:$0xff]
    %v133 = vld [vmem:[#allocation2 + $0x350] sm:$0xff]
    %v134 = vld [vmem:[#allocation2 + $0x358] sm:$0xff]
    %v135 = vld [vmem:[#allocation2 + $0x360] sm:$0xff]
    %v136 = vld [vmem:[#allocation2 + $0x368] sm:$0xff]
    %v137 = vld [vmem:[#allocation2 + $0x370] sm:$0xff]
    %v138 = vld [vmem:[#allocation2 + $0x378] sm:$0xff]
    %v139 = vld [vmem:[#allocation2 + $0x380] sm:$0xff]
    %v140 = vld [vmem:[#allocation2 + $0x388] sm:$0xff]
    %v141 = vld [vmem:[#allocation2 + $0x390] sm:$0xff]
    %v142 = vld [vmem:[#allocation2 + $0x398] sm:$0xff]
    %v143 = vld [vmem:[#allocation2 + $0x3a0] sm:$0xff]
    %v144 = vld [vmem:[#allocation2 + $0x3a8] sm:$0xff]
    %v145 = vld [vmem:[#allocation2 + $0x3b0] sm:$0xff]
    %v146 = vld [vmem:[#allocation2 + $0x3b8] sm:$0xff]
    %v147 = vld [vmem:[#allocation2 + $0x3c0] sm:$0xff]
    %v148 = vld [vmem:[#allocation2 + $0x3c8] sm:$0xff]
    %v149 = vld [vmem:[#allocation2 + $0x3d0] sm:$0xff]
    %v150 = vld [vmem:[#allocation2 + $0x3d8] sm:$0xff]
    %v151 = vld [vmem:[#allocation2 + $0x3e0] sm:$0xff]
    %v152 = vld [vmem:[#allocation2 + $0x3e8] sm:$0xff]
    %v153 = vld [vmem:[#allocation2 + $0x3f0] sm:$0xff]
    %v154 = vld [vmem:[#allocation2 + $0x3f8] sm:$0xff]
    %v155 = vld [vmem:[#allocation2 + $0x400] sm:$0xff]
    %v156 = vld [vmem:[#allocation2 + $0x408] sm:$0xff]
    %v157 = vld [vmem:[#allocation2 + $0x410] sm:$0xff]
    %v158 = vld [vmem:[#allocation2 + $0x418] sm:$0xff]
    %v159 = vld [vmem:[#allocation2 + $0x420] sm:$0xff]
    %v160 = vld [vmem:[#allocation2 + $0x428] sm:$0xff]
    %v161 = vld [vmem:[#allocation2 + $0x430] sm:$0xff]
    %v162 = vld [vmem:[#allocation2 + $0x438] sm:$0xff]
    %v163 = vld [vmem:[#allocation2 + $0x440] sm:$0xff]
    %v164 = vld [vmem:[#allocation2 + $0x448] sm:$0xff]
    %v165 = vld [vmem:[#allocation2 + $0x450] sm:$0xff]
    %v166 = vld [vmem:[#allocation2 + $0x458] sm:$0xff]
    %v167 = vld [vmem:[#allocation2 + $0x460] sm:$0xff]
    %v168 = vld [vmem:[#allocation2 + $0x468] sm:$0xff]
    %v169 = vld [vmem:[#allocation2 + $0x470] sm:$0xff]
    %v170 = vld [vmem:[#allocation2 + $0x478] sm:$0xff]
    %v171 = vld [vmem:[#allocation2 + $0x480] sm:$0xff]
    %v172 = vld [vmem:[#allocation2 + $0x488] sm:$0xff]
    %v173 = vld [vmem:[#allocation2 + $0x490] sm:$0xff]
    %v174 = vld [vmem:[#allocation2 + $0x498] sm:$0xff]
    %v175 = vld [vmem:[#allocation2 + $0x4a0] sm:$0xff]
    %v176 = vld [vmem:[#allocation2 + $0x4a8] sm:$0xff]
    %v177 = vld [vmem:[#allocation2 + $0x4b0] sm:$0xff]
    %v178 = vld [vmem:[#allocation2 + $0x4b8] sm:$0xff]
    %v179 = vld [vmem:[#allocation2 + $0x4c0] sm:$0xff]
    %v180 = vld [vmem:[#allocation2 + $0x4c8] sm:$0xff]
    %v181 = vld [vmem:[#allocation2 + $0x4d0] sm:$0xff]
    %v182 = vld [vmem:[#allocation2 + $0x4d8] sm:$0xff]
    %v183 = vld [vmem:[#allocation2 + $0x4e0] sm:$0xff]
    %v184 = vld [vmem:[#allocation2 + $0x4e8] sm:$0xff]
    %v185 = vld [vmem:[#allocation2 + $0x4f0] sm:$0xff]
    %v186 = vld [vmem:[#allocation2 + $0x4f8] sm:$0xff]
    %v187 = vld [vmem:[#allocation2 + $0x500] sm:$0xff]
    %v188 = vld [vmem:[#allocation2 + $0x508] sm:$0xff]
    %v189 = vld [vmem:[#allocation2 + $0x510] sm:$0xff]
    %v190 = vld [vmem:[#allocation2 + $0x518] sm:$0xff]
    %v191 = vld [vmem:[#allocation2 + $0x520] sm:$0xff]
    %v192 = vld [vmem:[#allocation2 + $0x528] sm:$0xff]
    %v193 = vld [vmem:[#allocation2 + $0x530] sm:$0xff]
    %v194 = vld [vmem:[#allocation2 + $0x538] sm:$0xff]
    %v195 = vld [vmem:[#allocation2 + $0x540] sm:$0xff]
    %v196 = vld [vmem:[#allocation2 + $0x548] sm:$0xff]
    %v197 = vld [vmem:[#allocation2 + $0x550] sm:$0xff]
    %v198 = vld [vmem:[#allocation2 + $0x558] sm:$0xff]
    %v199 = vld [vmem:[#allocation2 + $0x560] sm:$0xff]
    %v200 = vld [vmem:[#allocation2 + $0x568] sm:$0xff]
    %v201 = vld [vmem:[#allocation2 + $0x570] sm:$0xff]
    %v202 = vld [vmem:[#allocation2 + $0x578] sm:$0xff]
    %v203 = vld [vmem:[#allocation2 + $0x580] sm:$0xff]
    %v204 = vld [vmem:[#allocation2 + $0x588] sm:$0xff]
    %v205 = vld [vmem:[#allocation2 + $0x590] sm:$0xff]
    %v206 = vld [vmem:[#allocation2 + $0x598] sm:$0xff]
    %v207 = vld [vmem:[#allocation2 + $0x5a0] sm:$0xff]
    %v208 = vld [vmem:[#allocation2 + $0x5a8] sm:$0xff]
    %v209 = vld [vmem:[#allocation2 + $0x5b0] sm:$0xff]
    %v210 = vld [vmem:[#allocation2 + $0x5b8] sm:$0xff]
    %v211 = vld [vmem:[#allocation2 + $0x5c0] sm:$0xff]
    %v212 = vld [vmem:[#allocation2 + $0x5c8] sm:$0xff]
    %v213 = vld [vmem:[#allocation2 + $0x5d0] sm:$0xff]
    %v214 = vld [vmem:[#allocation2 + $0x5d8] sm:$0xff]
    %v215 = vld [vmem:[#allocation2 + $0x5e0] sm:$0xff]
    %v216 = vld [vmem:[#allocation2 + $0x5e8] sm:$0xff]
    %v217 = vld [vmem:[#allocation2 + $0x5f0] sm:$0xff]
    %v218 = vld [vmem:[#allocation2 + $0x5f8] sm:$0xff]
    %v219 = vld [vmem:[#allocation2 + $0x600] sm:$0xff]
    %v220 = vld [vmem:[#allocation2 + $0x608] sm:$0xff]
    %v221 = vld [vmem:[#allocation2 + $0x610] sm:$0xff]
    %v222 = vld [vmem:[#allocation2 + $0x618] sm:$0xff]
    %v223 = vld [vmem:[#allocation2 + $0x620] sm:$0xff]
    %v224 = vld [vmem:[#allocation2 + $0x628] sm:$0xff]
    %v225 = vld [vmem:[#allocation2 + $0x630] sm:$0xff]
    %v226 = vld [vmem:[#allocation2 + $0x638] sm:$0xff]
    %v227 = vld [vmem:[#allocation2 + $0x640] sm:$0xff]
    %v228 = vld [vmem:[#allocation2 + $0x648] sm:$0xff]
    %v229 = vld [vmem:[#allocation2 + $0x650] sm:$0xff]
    %v230 = vld [vmem:[#allocation2 + $0x658] sm:$0xff]
    %v231 = vld [vmem:[#allocation2 + $0x660] sm:$0xff]
    %v232 = vld [vmem:[#allocation2 + $0x668] sm:$0xff]
    %v233 = vld [vmem:[#allocation2 + $0x670] sm:$0xff]
    %v234 = vld [vmem:[#allocation2 + $0x678] sm:$0xff]
    %v235 = vld [vmem:[#allocation2 + $0x680] sm:$0xff]
    %v236 = vld [vmem:[#allocation2 + $0x688] sm:$0xff]
    %v237 = vld [vmem:[#allocation2 + $0x690] sm:$0xff]
    %v238 = vld [vmem:[#allocation2 + $0x698] sm:$0xff]
    %v239 = vld [vmem:[#allocation2 + $0x6a0] sm:$0xff]
    %v240 = vld [vmem:[#allocation2 + $0x6a8] sm:$0xff]
    %v241 = vld [vmem:[#allocation2 + $0x6b0] sm:$0xff]
    %v242 = vld [vmem:[#allocation2 + $0x6b8] sm:$0xff]
    %v243 = vld [vmem:[#allocation2 + $0x6c0] sm:$0xff]
    %v244 = vld [vmem:[#allocation2 + $0x6c8] sm:$0xff]
    %v245 = vld [vmem:[#allocation2 + $0x6d0] sm:$0xff]
    %v246 = vld [vmem:[#allocation2 + $0x6d8] sm:$0xff]
    %v247 = vld [vmem:[#allocation2 + $0x6e0] sm:$0xff]
    %v248 = vld [vmem:[#allocation2 + $0x6e8] sm:$0xff]
    %v249 = vld [vmem:[#allocation2 + $0x6f0] sm:$0xff]
    %v250 = vld [vmem:[#allocation2 + $0x6f8] sm:$0xff]
    %v251 = vld [vmem:[#allocation2 + $0x700] sm:$0xff]
    %v252 = vld [vmem:[#allocation2 + $0x708] sm:$0xff]
    %v253 = vld [vmem:[#allocation2 + $0x710] sm:$0xff]
    %v254 = vld [vmem:[#allocation2 + $0x718] sm:$0xff]
    %v255 = vld [vmem:[#allocation2 + $0x720] sm:$0xff]
    %v256 = vld [vmem:[#allocation2 + $0x728] sm:$0xff]
    %v257 = vld [vmem:[#allocation2 + $0x730] sm:$0xff]
    %v258 = vld [vmem:[#allocation2 + $0x738] sm:$0xff]
    %v259 = vld [vmem:[#allocation2 + $0x740] sm:$0xff]
    %v260 = vld [vmem:[#allocation2 + $0x748] sm:$0xff]
    %v261 = vld [vmem:[#allocation2 + $0x750] sm:$0xff]
    %v262 = vld [vmem:[#allocation2 + $0x758] sm:$0xff]
    %v263 = vld [vmem:[#allocation2 + $0x760] sm:$0xff]
    %v264 = vld [vmem:[#allocation2 + $0x768] sm:$0xff]
    %v265 = vld [vmem:[#allocation2 + $0x770] sm:$0xff]
    %v266 = vld [vmem:[#allocation2 + $0x778] sm:$0xff]
    %v267 = vld [vmem:[#allocation2 + $0x780] sm:$0xff]
    %v268 = vld [vmem:[#allocation2 + $0x788] sm:$0xff]
    %v269 = vld [vmem:[#allocation2 + $0x790] sm:$0xff]
    %v270 = vld [vmem:[#allocation2 + $0x798] sm:$0xff]
    %v271 = vld [vmem:[#allocation2 + $0x7a0] sm:$0xff]
    %v272 = vld [vmem:[#allocation2 + $0x7a8] sm:$0xff]
    %v273 = vld [vmem:[#allocation2 + $0x7b0] sm:$0xff]
    %v274 = vld [vmem:[#allocation2 + $0x7b8] sm:$0xff]
    %v275 = vld [vmem:[#allocation2 + $0x7c0] sm:$0xf]
    %v276 = vld [vmem:[#allocation2 + $0x7c8] sm:$0xf]
    %v277 = vld [vmem:[#allocation2 + $0x7d0] sm:$0xf]
    %v278 = vld [vmem:[#allocation2 + $0x7d8] sm:$0xf]
    %s279 = scalar_lea.vmem [#allocation2], 5216
    %v280 = vld [vmem:[%s279] ss:$8 sm:$0xf]
    %v281 = vld [vmem:[#allocation2 + $0x7e0] sm:$0xff]
    %v282 = vld [vmem:[#allocation2 + $0x800] sm:$0xff]
    %v283 = vld [vmem:[#allocation2 + $0x820] sm:$0xff]
    %v284 = vld [vmem:[#allocation2 + $0x840] sm:$0xff]
    %v285 = vld [vmem:[#allocation2 + $0x860] sm:$0xff]
    %v286 = vld [vmem:[#allocation2 + $0x880] sm:$0xff]
    %v287 = vld [vmem:[#allocation2 + $0x8a0] sm:$0xff]
    %v288 = vld [vmem:[#allocation2 + $0x8c0] sm:$0xff]
    %v289 = vld [vmem:[#allocation2 + $0x8e0] sm:$0xff]
    %v290 = vld [vmem:[#allocation2 + $0x900] sm:$0xff]
    %v291 = vld [vmem:[#allocation2 + $0x920] sm:$0xff]
    %v292 = vld [vmem:[#allocation2 + $0x940] sm:$0xff]
    %v293 = vld [vmem:[#allocation2 + $0x960] sm:$0xff]
    %v294 = vld [vmem:[#allocation2 + $0x980] sm:$0xff]
    %v295 = vld [vmem:[#allocation2 + $0x9a0] sm:$0xff]
    %v296 = vld [vmem:[#allocation2 + $0x9c0] sm:$0xff]
    %v297 = vld [vmem:[#allocation2 + $0x9e0] sm:$0xff]
    %v298 = vld [vmem:[#allocation2 + $0xa00] sm:$0xff]
    %v299 = vld [vmem:[#allocation2 + $0xa20] sm:$0xff]
    %v300 = vld [vmem:[#allocation2 + $0xa40] sm:$0xff]
    %v301 = vld [vmem:[#allocation2 + $0xa60] sm:$0xff]
    %v302 = vld [vmem:[#allocation2 + $0xa80] sm:$0xff]
    %v303 = vld [vmem:[#allocation2 + $0xaa0] sm:$0xff]
    %v304 = vld [vmem:[#allocation2 + $0xac0] sm:$0xff]
    %v305 = vld [vmem:[#allocation2 + $0xae0] sm:$0xff]
    %v306 = vld [vmem:[#allocation2 + $0xb00] sm:$0xff]
    %v307 = vld [vmem:[#allocation2 + $0xb20] sm:$0xff]
    %v308 = vld [vmem:[#allocation2 + $0xb40] sm:$0xff]
    %v309 = vld [vmem:[#allocation2 + $0xb60] sm:$0xff]
    %v310 = vld [vmem:[#allocation2 + $0xb80] sm:$0xff]
    %v311 = vld [vmem:[#allocation2 + $0xba0] sm:$0xff]
    %v312 = vld [vmem:[#allocation2 + $0xbc0] sm:$0xff]
    %v313 = vld [vmem:[#allocation2 + $0xbe0] sm:$0xff]
    %v314 = vld [vmem:[#allocation2 + $0xc00] sm:$0xff]
    %v315 = vld [vmem:[#allocation2 + $0xc20] sm:$0xff]
    %v316 = vld [vmem:[#allocation2 + $0xc40] sm:$0xff]
    %v317 = vld [vmem:[#allocation2 + $0xc60] sm:$0xff]
    %v318 = vld [vmem:[#allocation2 + $0xc80] sm:$0xff]
    %v319 = vld [vmem:[#allocation2 + $0xca0] sm:$0xff]
    %v320 = vld [vmem:[#allocation2 + $0xcc0] sm:$0xff]
    %v321 = vld [vmem:[#allocation2 + $0xce0] sm:$0xff]
    %v322 = vld [vmem:[#allocation2 + $0xd00] sm:$0xff]
    %v323 = vld [vmem:[#allocation2 + $0xd20] sm:$0xff]
    %v324 = vld [vmem:[#allocation2 + $0xd40] sm:$0xff]
    %v325 = vld [vmem:[#allocation2 + $0xd60] sm:$0xff]
    %v326 = vld [vmem:[#allocation2 + $0xd80] sm:$0xff]
    %v327 = vld [vmem:[#allocation2 + $0xda0] sm:$0xff]
    %v328 = vld [vmem:[#allocation2 + $0xdc0] sm:$0xff]
    %v329 = vld [vmem:[#allocation2 + $0xde0] sm:$0xff]
    %v330 = vld [vmem:[#allocation2 + $0xe00] sm:$0xff]
    %v331 = vld [vmem:[#allocation2 + $0xe20] sm:$0xff]
    %v332 = vld [vmem:[#allocation2 + $0xe40] sm:$0xff]
    %v333 = vld [vmem:[#allocation2 + $0xe60] sm:$0xff]
    %v334 = vld [vmem:[#allocation2 + $0xe80] sm:$0xff]
    %v335 = vld [vmem:[#allocation2 + $0xea0] sm:$0xff]
    %v336 = vld [vmem:[#allocation2 + $0xec0] sm:$0xff]
    %v337 = vld [vmem:[#allocation2 + $0xee0] sm:$0xff]
    %v338 = vld [vmem:[#allocation2 + $0xf00] sm:$0xff]
    %v339 = vld [vmem:[#allocation2 + $0xf20] sm:$0xff]
    %v340 = vld [vmem:[#allocation2 + $0xf40] sm:$0xff]
    %v341 = vld [vmem:[#allocation2 + $0xf60] sm:$0xff]
    %v342 = vld [vmem:[#allocation2 + $0xf80] sm:$0xff]
    %v343 = vld [vmem:[#allocation2 + $0xfa0] sm:$0xff]
    %v344 = vld [vmem:[#allocation2 + $0xfc0] sm:$0xff]
    %v345 = vld [vmem:[#allocation2 + $0x1480] ss:$0 sm:$0xff]
    %v346 = vld [vmem:[#allocation2 + $0xfe0] sm:$0xff]
    %v347 = vld [vmem:[#allocation2 + $0x1000] sm:$0xff]
    %v348 = vld [vmem:[#allocation2 + $0x1020] sm:$0xff]
    %v349 = vld [vmem:[#allocation2 + $0x1040] sm:$0xff]
    %v350 = vld [vmem:[#allocation2 + $0x14a0] ss:$0 sm:$0xff]
    %v351 = vld [vmem:[#allocation2 + $0x1060] sm:$0xff]
    %v352 = vld [vmem:[#allocation2 + $0x1080] sm:$0xff]
    %v353 = vld [vmem:[#allocation2 + $0x10a0] sm:$0xff]
    %v354 = vld [vmem:[#allocation2 + $0x10c0] sm:$0xff]
    %v355 = vld [vmem:[#allocation2 + $0x10e0] sm:$0xff]
    %v356 = vld [vmem:[#allocation2 + $0x1100] sm:$0xff]
    %v357 = vld [vmem:[#allocation2 + $0x1120] sm:$0xff]
    %v358 = vld [vmem:[#allocation2 + $0x1140] sm:$0xff]
    %v359 = vld [vmem:[#allocation2 + $0x1160] sm:$0xff]
    %v360 = vld [vmem:[#allocation2 + $0x1180] sm:$0xff]
    %v361 = vld [vmem:[#allocation2 + $0x11a0] sm:$0xff]
    %v362 = vld [vmem:[#allocation2 + $0x11c0] sm:$0xff]
    %v363 = vld [vmem:[#allocation2 + $0x11e0] sm:$0xff]
    %v364 = vld [vmem:[#allocation2 + $0x1200] sm:$0xff]
    %v365 = vld [vmem:[#allocation2 + $0x1220] sm:$0xff]
    %v366 = vld [vmem:[#allocation2 + $0x1240] sm:$0xff]
    %v367 = vld [vmem:[#allocation2 + $0x14c0] ss:$0 sm:$0xff]
    %v368 = vld [vmem:[#allocation2 + $0x1260] sm:$0xff]
    %v369 = vld [vmem:[#allocation2 + $0x1280] sm:$0xff]
    %v370 = vld [vmem:[#allocation2 + $0x12a0] sm:$0xff]
    %v371 = vld [vmem:[#allocation2 + $0x12c0] sm:$0xff]
    %v372 = vld [vmem:[#allocation2 + $0x12e0] sm:$0xff]
    %v373 = vld [vmem:[#allocation2 + $0x1300] sm:$0xff]
    %v374 = vld [vmem:[#allocation2 + $0x1320] sm:$0xff]
    %v375 = vld [vmem:[#allocation2 + $0x1340] sm:$0xff]
    %v376 = vld [vmem:[#allocation2 + $0x1360] sm:$0xff]
    %v377 = vld [vmem:[#allocation2 + $0x1380] sm:$0xff]
    %v378 = vld [vmem:[#allocation2 + $0x13a0] sm:$0xff]
    %v379 = vld [vmem:[#allocation2 + $0x13c0] sm:$0xff]
    %v380 = vld [vmem:[#allocation2 + $0x13e0] sm:$0xff]
    %v381 = vld [vmem:[#allocation2 + $0x1400] sm:$0xff]
    %v382 = vld [vmem:[#allocation2 + $0x1420] sm:$0xff]
    %v383 = vld [vmem:[#allocation2 + $0x1440] sm:$0xff]
    %v384 = vld [vmem:[#allocation2 + $0x14e0] ss:$0 sm:$0xff]
    %v386 = vlaneseq
    %v387 = vshrl.u32 %v386, 7
    %v388 = vsub.s32 0, %v387
    %v389 = vrot.slane %v280, %v388
    %v390 = vlaneseq
    %v391 = vshrl.u32 %v390, 7
    %v392 = vsub.s32 1, %v391
    %v393 = vrot.slane %v280, %v392
    %v394 = vlaneseq
    %v395 = vshrl.u32 %v394, 7
    %v396 = vsub.s32 2, %v395
    %v397 = vrot.slane %v280, %v396
    %v398 = vlaneseq
    %v399 = vshrl.u32 %v398, 7
    %v400 = vsub.s32 3, %v399
    %v401 = vrot.slane %v280, %v400
    %v407 = vcombine.high %v26, %v26
    %v409 = vunpack.c.l.s4 1983009808
    %v410 = vunpack.c.0.s8 %v409
    %v411 = vlaneseq
    %v412 = vshrl.u32 %v411, 7
    %v413 = vsub.s32 %v410, %v412
    %v414 = vrot.slane %v26, %v413
    %v416 = vunpack.c.l.s4 1983009808
    %v417 = vunpack.c.0.s8 %v416
    %v418 = vlaneseq
    %v419 = vshrl.u32 %v418, 7
    %v420 = vsub.s32 %v417, %v419
    %v421 = vrot.slane %v407, %v420
    %v422 = vcombine.high %v414, %v414
    %v423 = vcombine.high %v421, %v421
    %vm427 = vcmask 949248
    %v428 = vsel %vm427, %v423, 0
    %vm430 = vcmask 1043456
    %v432 = vsel %vm430, %v275, 0
    %v435 = vsel %vm430, %v276, 0
    %v438 = vsel %vm430, %v277, 0
    %v441 = vsel %vm430, %v278, 0
    %443 = vmatprep.subr.mxu0 %v88
    %444 = vmatpush1.msra.mxu0 %v87
    %445 = vmatprep.subr.mxu0 %v84
    %446 = vmatpush1.msra.mxu0 %v83
    %447 = vmatprep.subr.mxu0 %v80
    %448 = vmatpush1.msra.mxu0 %v79
    %449 = vmatprep.subr.mxu0 %v76
    %450 = vmatpush1.msra.mxu0 %v75
    %451 = vmatprep.subr.mxu0 %v72
    %452 = vmatpush1.msra.mxu0 %v71
    %453 = vmatprep.subr.mxu0 %v68
    %454 = vmatpush1.msra.mxu0 %v67
    %455 = vmatprep.subr.mxu0 %v64
    %456 = vmatpush1.msra.mxu0 %v63
    %457 = vmatprep.subr.mxu0 %v60
    %458 = vmatpush1.msra.mxu0 %v59
    %459 = vmatprep.subr.mxu0 %v56
    %460 = vmatpush1.msra.mxu0 %v55
    %461 = vmatprep.subr.mxu0 %v52
    %462 = vmatpush1.msra.mxu0 %v51
    %463 = vmatprep.subr.mxu0 %v48
    %464 = vmatpush1.msra.mxu0 %v47
    %465 = vmatprep.subr.mxu0 %v44
    %466 = vmatpush1.msra.mxu0 %v43
    %467 = vmatprep.subr.mxu0 %v40
    %468 = vmatpush1.msra.mxu0 %v39
    %469 = vmatprep.subr.mxu0 %v36
    %470 = vmatpush1.msra.mxu0 %v35
    %471 = vmatprep.subr.mxu0 %v32
    %472 = vmatpush1.msra.mxu0 %v31
    %473 = vmatprep.subr.mxu0 %v28
    %474 = vmatpush1.msra.mxu0 %v27
    %475 = vmatprep.subr.mxu0 %v152
    %476 = vmatpush2.msra.mxu0 %v151
    %477 = vmatprep.subr.mxu0 %v148
    %478 = vmatpush2.msra.mxu0 %v147
    %479 = vmatprep.subr.mxu0 %v144
    %480 = vmatpush2.msra.mxu0 %v143
    %481 = vmatprep.subr.mxu0 %v140
    %482 = vmatpush2.msra.mxu0 %v139
    %483 = vmatprep.subr.mxu0 %v136
    %484 = vmatpush2.msra.mxu0 %v135
    %485 = vmatprep.subr.mxu0 %v132
    %486 = vmatpush2.msra.mxu0 %v131
    %487 = vmatprep.subr.mxu0 %v128
    %488 = vmatpush2.msra.mxu0 %v127
    %489 = vmatprep.subr.mxu0 %v124
    %490 = vmatpush2.msra.mxu0 %v123
    %491 = vmatprep.subr.mxu0 %v120
    %492 = vmatpush2.msra.mxu0 %v119
    %493 = vmatprep.subr.mxu0 %v116
    %494 = vmatpush2.msra.mxu0 %v115
    %495 = vmatprep.subr.mxu0 %v112
    %496 = vmatpush2.msra.mxu0 %v111
    %497 = vmatprep.subr.mxu0 %v108
    %498 = vmatpush2.msra.mxu0 %v107
    %499 = vmatprep.subr.mxu0 %v104
    %500 = vmatpush2.msra.mxu0 %v103
    %501 = vmatprep.subr.mxu0 %v100
    %502 = vmatpush2.msra.mxu0 %v99
    %503 = vmatprep.subr.mxu0 %v96
    %504 = vmatpush2.msra.mxu0 %v95
    %505 = vmatprep.subr.mxu0 %v92
    %506 = vmatpush2.msra.mxu0 %v91
    %507 = vmatprep.mubr.f32.mxu0 %v422
    %508 = vmatmul.mubr.f32.gmra.mxu0 %v414
    %v509 = vpop.f32.mrf.mxu0
    %v510 = vadd.f32 %v389, %v509
    %v511 = vpop.f32.mrf.mxu0
    %v512 = vadd.f32 %v393, %v511
    %513 = vdwg.mxu0
    %514 = vmatprep.subr.mxu0 %v216
    %515 = vmatpush1.msra.mxu0 %v215
    %516 = vmatprep.subr.mxu0 %v212
    %517 = vmatpush1.msra.mxu0 %v211
    %518 = vmatprep.subr.mxu0 %v208
    %519 = vmatpush1.msra.mxu0 %v207
    %520 = vmatprep.subr.mxu0 %v204
    %521 = vmatpush1.msra.mxu0 %v203
    %522 = vmatprep.subr.mxu0 %v200
    %523 = vmatpush1.msra.mxu0 %v199
    %524 = vmatprep.subr.mxu0 %v196
    %525 = vmatpush1.msra.mxu0 %v195
    %526 = vmatprep.subr.mxu0 %v192
    %527 = vmatpush1.msra.mxu0 %v191
    %528 = vmatprep.subr.mxu0 %v188
    %529 = vmatpush1.msra.mxu0 %v187
    %530 = vmatprep.subr.mxu0 %v184
    %531 = vmatpush1.msra.mxu0 %v183
    %532 = vmatprep.subr.mxu0 %v180
    %533 = vmatpush1.msra.mxu0 %v179
    %534 = vmatprep.subr.mxu0 %v176
    %535 = vmatpush1.msra.mxu0 %v175
    %536 = vmatprep.subr.mxu0 %v172
    %537 = vmatpush1.msra.mxu0 %v171
    %538 = vmatprep.subr.mxu0 %v168
    %539 = vmatpush1.msra.mxu0 %v167
    %540 = vmatprep.subr.mxu0 %v164
    %541 = vmatpush1.msra.mxu0 %v163
    %542 = vmatprep.subr.mxu0 %v160
    %543 = vmatpush1.msra.mxu0 %v159
    %544 = vmatprep.subr.mxu0 %v156
    %545 = vmatpush1.msra.mxu0 %v155
    %546 = vmatprep.subr.mxu0 0.0
    %547 = vmatpush2.msra.mxu0 0.0
    %548 = vmatprep.subr.mxu0 %v435
    %549 = vmatpush2.msra.mxu0 %v432
    %550 = vmatprep.subr.mxu0 %v272
    %551 = vmatpush2.msra.mxu0 %v271
    %552 = vmatprep.subr.mxu0 %v268
    %553 = vmatpush2.msra.mxu0 %v267
    %554 = vmatprep.subr.mxu0 %v264
    %555 = vmatpush2.msra.mxu0 %v263
    %556 = vmatprep.subr.mxu0 %v260
    %557 = vmatpush2.msra.mxu0 %v259
    %558 = vmatprep.subr.mxu0 %v256
    %559 = vmatpush2.msra.mxu0 %v255
    %560 = vmatprep.subr.mxu0 %v252
    %561 = vmatpush2.msra.mxu0 %v251
    %562 = vmatprep.subr.mxu0 %v248
    %563 = vmatpush2.msra.mxu0 %v247
    %564 = vmatprep.subr.mxu0 %v244
    %565 = vmatpush2.msra.mxu0 %v243
    %566 = vmatprep.subr.mxu0 %v240
    %567 = vmatpush2.msra.mxu0 %v239
    %568 = vmatprep.subr.mxu0 %v236
    %569 = vmatpush2.msra.mxu0 %v235
    %570 = vmatprep.subr.mxu0 %v232
    %571 = vmatpush2.msra.mxu0 %v231
    %572 = vmatprep.subr.mxu0 %v228
    %573 = vmatpush2.msra.mxu0 %v227
    %574 = vmatprep.subr.mxu0 %v224
    %575 = vmatpush2.msra.mxu0 %v223
    %576 = vmatprep.subr.mxu0 %v220
    %577 = vmatpush2.msra.mxu0 %v219
    %578 = vmatprep.mubr.f32.mxu0 %v428
    %579 = vmatmul.mubr.f32.gmra.mxu0 %v421
    %v580 = vpop.f32.mrf.mxu0
    %v581 = vadd.f32 %v510, %v580
    %v582 = vpop.f32.mrf.mxu0
    %v583 = vadd.f32 %v512, %v582
    %584 = vdwg.mxu0
    %585 = vmatprep.subr.mxu0 %v90
    %586 = vmatpush1.msra.mxu0 %v89
    %587 = vmatprep.subr.mxu0 %v86
    %588 = vmatpush1.msra.mxu0 %v85
    %589 = vmatprep.subr.mxu0 %v82
    %590 = vmatpush1.msra.mxu0 %v81
    %591 = vmatprep.subr.mxu0 %v78
    %592 = vmatpush1.msra.mxu0 %v77
    %593 = vmatprep.subr.mxu0 %v74
    %594 = vmatpush1.msra.mxu0 %v73
    %595 = vmatprep.subr.mxu0 %v70
    %596 = vmatpush1.msra.mxu0 %v69
    %597 = vmatprep.subr.mxu0 %v66
    %598 = vmatpush1.msra.mxu0 %v65
    %599 = vmatprep.subr.mxu0 %v62
    %600 = vmatpush1.msra.mxu0 %v61
    %601 = vmatprep.subr.mxu0 %v58
    %602 = vmatpush1.msra.mxu0 %v57
    %603 = vmatprep.subr.mxu0 %v54
    %604 = vmatpush1.msra.mxu0 %v53
    %605 = vmatprep.subr.mxu0 %v50
    %606 = vmatpush1.msra.mxu0 %v49
    %607 = vmatprep.subr.mxu0 %v46
    %608 = vmatpush1.msra.mxu0 %v45
    %609 = vmatprep.subr.mxu0 %v42
    %610 = vmatpush1.msra.mxu0 %v41
    %611 = vmatprep.subr.mxu0 %v38
    %612 = vmatpush1.msra.mxu0 %v37
    %613 = vmatprep.subr.mxu0 %v34
    %614 = vmatpush1.msra.mxu0 %v33
    %615 = vmatprep.subr.mxu0 %v30
    %616 = vmatpush1.msra.mxu0 %v29
    %617 = vmatprep.subr.mxu0 %v154
    %618 = vmatpush2.msra.mxu0 %v153
    %619 = vmatprep.subr.mxu0 %v150
    %620 = vmatpush2.msra.mxu0 %v149
    %621 = vmatprep.subr.mxu0 %v146
    %622 = vmatpush2.msra.mxu0 %v145
    %623 = vmatprep.subr.mxu0 %v142
    %624 = vmatpush2.msra.mxu0 %v141
    %625 = vmatprep.subr.mxu0 %v138
    %626 = vmatpush2.msra.mxu0 %v137
    %627 = vmatprep.subr.mxu0 %v134
    %628 = vmatpush2.msra.mxu0 %v133
    %629 = vmatprep.subr.mxu0 %v130
    %630 = vmatpush2.msra.mxu0 %v129
    %631 = vmatprep.subr.mxu0 %v126
    %632 = vmatpush2.msra.mxu0 %v125
    %633 = vmatprep.subr.mxu0 %v122
    %634 = vmatpush2.msra.mxu0 %v121
    %635 = vmatprep.subr.mxu0 %v118
    %636 = vmatpush2.msra.mxu0 %v117
    %637 = vmatprep.subr.mxu0 %v114
    %638 = vmatpush2.msra.mxu0 %v113
    %639 = vmatprep.subr.mxu0 %v110
    %640 = vmatpush2.msra.mxu0 %v109
    %641 = vmatprep.subr.mxu0 %v106
    %642 = vmatpush2.msra.mxu0 %v105
    %643 = vmatprep.subr.mxu0 %v102
    %644 = vmatpush2.msra.mxu0 %v101
    %645 = vmatprep.subr.mxu0 %v98
    %646 = vmatpush2.msra.mxu0 %v97
    %647 = vmatprep.subr.mxu0 %v94
    %648 = vmatpush2.msra.mxu0 %v93
    %649 = vmatprep.mubr.f32.mxu0 %v422
    %650 = vmatmul.mubr.f32.gmra.mxu0 %v414
    %v651 = vpop.f32.mrf.mxu0
    %v652 = vadd.f32 %v397, %v651
    %v653 = vpop.f32.mrf.mxu0
    %v654 = vadd.f32 %v401, %v653
    %655 = vdwg.mxu0
    %656 = vmatprep.subr.mxu0 %v218
    %657 = vmatpush1.msra.mxu0 %v217
    %658 = vmatprep.subr.mxu0 %v214
    %659 = vmatpush1.msra.mxu0 %v213
    %660 = vmatprep.subr.mxu0 %v210
    %661 = vmatpush1.msra.mxu0 %v209
    %662 = vmatprep.subr.mxu0 %v206
    %663 = vmatpush1.msra.mxu0 %v205
    %664 = vmatprep.subr.mxu0 %v202
    %665 = vmatpush1.msra.mxu0 %v201
    %666 = vmatprep.subr.mxu0 %v198
    %667 = vmatpush1.msra.mxu0 %v197
    %668 = vmatprep.subr.mxu0 %v194
    %669 = vmatpush1.msra.mxu0 %v193
    %670 = vmatprep.subr.mxu0 %v190
    %671 = vmatpush1.msra.mxu0 %v189
    %672 = vmatprep.subr.mxu0 %v186
    %673 = vmatpush1.msra.mxu0 %v185
    %674 = vmatprep.subr.mxu0 %v182
    %675 = vmatpush1.msra.mxu0 %v181
    %676 = vmatprep.subr.mxu0 %v178
    %677 = vmatpush1.msra.mxu0 %v177
    %678 = vmatprep.subr.mxu0 %v174
    %679 = vmatpush1.msra.mxu0 %v173
    %680 = vmatprep.subr.mxu0 %v170
    %681 = vmatpush1.msra.mxu0 %v169
    %682 = vmatprep.subr.mxu0 %v166
    %683 = vmatpush1.msra.mxu0 %v165
    %684 = vmatprep.subr.mxu0 %v162
    %685 = vmatpush1.msra.mxu0 %v161
    %686 = vmatprep.subr.mxu0 %v158
    %687 = vmatpush1.msra.mxu0 %v157
    %688 = vmatprep.subr.mxu0 0.0
    %689 = vmatpush2.msra.mxu0 0.0
    %690 = vmatprep.subr.mxu0 %v441
    %691 = vmatpush2.msra.mxu0 %v438
    %692 = vmatprep.subr.mxu0 %v274
    %693 = vmatpush2.msra.mxu0 %v273
    %694 = vmatprep.subr.mxu0 %v270
    %695 = vmatpush2.msra.mxu0 %v269
    %696 = vmatprep.subr.mxu0 %v266
    %697 = vmatpush2.msra.mxu0 %v265
    %698 = vmatprep.subr.mxu0 %v262
    %699 = vmatpush2.msra.mxu0 %v261
    %700 = vmatprep.subr.mxu0 %v258
    %701 = vmatpush2.msra.mxu0 %v257
    %702 = vmatprep.subr.mxu0 %v254
    %703 = vmatpush2.msra.mxu0 %v253
    %704 = vmatprep.subr.mxu0 %v250
    %705 = vmatpush2.msra.mxu0 %v249
    %706 = vmatprep.subr.mxu0 %v246
    %707 = vmatpush2.msra.mxu0 %v245
    %708 = vmatprep.subr.mxu0 %v242
    %709 = vmatpush2.msra.mxu0 %v241
    %710 = vmatprep.subr.mxu0 %v238
    %711 = vmatpush2.msra.mxu0 %v237
    %712 = vmatprep.subr.mxu0 %v234
    %713 = vmatpush2.msra.mxu0 %v233
    %714 = vmatprep.subr.mxu0 %v230
    %715 = vmatpush2.msra.mxu0 %v229
    %716 = vmatprep.subr.mxu0 %v226
    %717 = vmatpush2.msra.mxu0 %v225
    %718 = vmatprep.subr.mxu0 %v222
    %719 = vmatpush2.msra.mxu0 %v221
    %720 = vmatprep.mubr.f32.mxu0 %v428
    %721 = vmatmul.mubr.f32.gmra.mxu0 %v421
    %v722 = vpop.f32.mrf.mxu0
    %v723 = vadd.f32 %v652, %v722
    %v724 = vpop.f32.mrf.mxu0
    %v725 = vadd.f32 %v654, %v724
    %726 = vdwg.mxu0
    %v727 = vmax.f32 %v581, 0.0
    %v728 = vmax.f32 %v583, 0.0
    %v729 = vmax.f32 %v723, 0.0
    %v730 = vmax.f32 %v725, 0.0
    %731 = vmatprep.subr.mxu0 0.0
    %732 = vmatpush1.msra.mxu0 %v296
    %733 = vmatprep.subr.mxu0 0.0
    %734 = vmatpush1.msra.mxu0 %v295
    %735 = vmatprep.subr.mxu0 0.0
    %736 = vmatpush1.msra.mxu0 %v294
    %737 = vmatprep.subr.mxu0 0.0
    %738 = vmatpush1.msra.mxu0 %v293
    %739 = vmatprep.subr.mxu0 0.0
    %740 = vmatpush1.msra.mxu0 %v292
    %741 = vmatprep.subr.mxu0 0.0
    %742 = vmatpush1.msra.mxu0 %v291
    %743 = vmatprep.subr.mxu0 0.0
    %744 = vmatpush1.msra.mxu0 %v290
    %745 = vmatprep.subr.mxu0 0.0
    %746 = vmatpush1.msra.mxu0 %v289
    %747 = vmatprep.subr.mxu0 0.0
    %748 = vmatpush1.msra.mxu0 %v288
    %749 = vmatprep.subr.mxu0 0.0
    %750 = vmatpush1.msra.mxu0 %v287
    %751 = vmatprep.subr.mxu0 0.0
    %752 = vmatpush1.msra.mxu0 %v286
    %753 = vmatprep.subr.mxu0 0.0
    %754 = vmatpush1.msra.mxu0 %v285
    %755 = vmatprep.subr.mxu0 0.0
    %756 = vmatpush1.msra.mxu0 %v284
    %757 = vmatprep.subr.mxu0 0.0
    %758 = vmatpush1.msra.mxu0 %v283
    %759 = vmatprep.subr.mxu0 0.0
    %760 = vmatpush1.msra.mxu0 %v282
    %761 = vmatprep.subr.mxu0 0.0
    %762 = vmatpush1.msra.mxu0 %v281
    %763 = vmatprep.subr.mxu0 0.0
    %764 = vmatpush2.msra.mxu0 %v312
    %765 = vmatprep.subr.mxu0 0.0
    %766 = vmatpush2.msra.mxu0 %v311
    %767 = vmatprep.subr.mxu0 0.0
    %768 = vmatpush2.msra.mxu0 %v310
    %769 = vmatprep.subr.mxu0 0.0
    %770 = vmatpush2.msra.mxu0 %v309
    %771 = vmatprep.subr.mxu0 0.0
    %772 = vmatpush2.msra.mxu0 %v308
    %773 = vmatprep.subr.mxu0 0.0
    %774 = vmatpush2.msra.mxu0 %v307
    %775 = vmatprep.subr.mxu0 0.0
    %776 = vmatpush2.msra.mxu0 %v306
    %777 = vmatprep.subr.mxu0 0.0
    %778 = vmatpush2.msra.mxu0 %v305
    %779 = vmatprep.subr.mxu0 0.0
    %780 = vmatpush2.msra.mxu0 %v304
    %781 = vmatprep.subr.mxu0 0.0
    %782 = vmatpush2.msra.mxu0 %v303
    %783 = vmatprep.subr.mxu0 0.0
    %784 = vmatpush2.msra.mxu0 %v302
    %785 = vmatprep.subr.mxu0 0.0
    %786 = vmatpush2.msra.mxu0 %v301
    %787 = vmatprep.subr.mxu0 0.0
    %788 = vmatpush2.msra.mxu0 %v300
    %789 = vmatprep.subr.mxu0 0.0
    %790 = vmatpush2.msra.mxu0 %v299
    %791 = vmatprep.subr.mxu0 0.0
    %792 = vmatpush2.msra.mxu0 %v298
    %793 = vmatprep.subr.mxu0 0.0
    %794 = vmatpush2.msra.mxu0 %v297
    %795 = vmatprep.mubr.f32.mxu0 %v728
    %796 = vmatmul.mubr.f32.gmra.mxu0 %v727
    %v797 = vpop.f32.mrf.mxu0
    %v798 = vadd.f32 %v345, %v797
    %v799 = vpop.f32.mrf.mxu0
    %800 = vdwg.mxu0
    %801 = vmatprep.subr.mxu0 0.0
    %802 = vmatpush1.msra.mxu0 %v328
    %803 = vmatprep.subr.mxu0 0.0
    %804 = vmatpush1.msra.mxu0 %v327
    %805 = vmatprep.subr.mxu0 0.0
    %806 = vmatpush1.msra.mxu0 %v326
    %807 = vmatprep.subr.mxu0 0.0
    %808 = vmatpush1.msra.mxu0 %v325
    %809 = vmatprep.subr.mxu0 0.0
    %810 = vmatpush1.msra.mxu0 %v324
    %811 = vmatprep.subr.mxu0 0.0
    %812 = vmatpush1.msra.mxu0 %v323
    %813 = vmatprep.subr.mxu0 0.0
    %814 = vmatpush1.msra.mxu0 %v322
    %815 = vmatprep.subr.mxu0 0.0
    %816 = vmatpush1.msra.mxu0 %v321
    %817 = vmatprep.subr.mxu0 0.0
    %818 = vmatpush1.msra.mxu0 %v320
    %819 = vmatprep.subr.mxu0 0.0
    %820 = vmatpush1.msra.mxu0 %v319
    %821 = vmatprep.subr.mxu0 0.0
    %822 = vmatpush1.msra.mxu0 %v318
    %823 = vmatprep.subr.mxu0 0.0
    %824 = vmatpush1.msra.mxu0 %v317
    %825 = vmatprep.subr.mxu0 0.0
    %826 = vmatpush1.msra.mxu0 %v316
    %827 = vmatprep.subr.mxu0 0.0
    %828 = vmatpush1.msra.mxu0 %v315
    %829 = vmatprep.subr.mxu0 0.0
    %830 = vmatpush1.msra.mxu0 %v314
    %831 = vmatprep.subr.mxu0 0.0
    %832 = vmatpush1.msra.mxu0 %v313
    %833 = vmatprep.subr.mxu0 0.0
    %834 = vmatpush2.msra.mxu0 %v344
    %835 = vmatprep.subr.mxu0 0.0
    %836 = vmatpush2.msra.mxu0 %v343
    %837 = vmatprep.subr.mxu0 0.0
    %838 = vmatpush2.msra.mxu0 %v342
    %839 = vmatprep.subr.mxu0 0.0
    %840 = vmatpush2.msra.mxu0 %v341
    %841 = vmatprep.subr.mxu0 0.0
    %842 = vmatpush2.msra.mxu0 %v340
    %843 = vmatprep.subr.mxu0 0.0
    %844 = vmatpush2.msra.mxu0 %v339
    %845 = vmatprep.subr.mxu0 0.0
    %846 = vmatpush2.msra.mxu0 %v338
    %847 = vmatprep.subr.mxu0 0.0
    %848 = vmatpush2.msra.mxu0 %v337
    %849 = vmatprep.subr.mxu0 0.0
    %850 = vmatpush2.msra.mxu0 %v336
    %851 = vmatprep.subr.mxu0 0.0
    %852 = vmatpush2.msra.mxu0 %v335
    %853 = vmatprep.subr.mxu0 0.0
    %854 = vmatpush2.msra.mxu0 %v334
    %855 = vmatprep.subr.mxu0 0.0
    %856 = vmatpush2.msra.mxu0 %v333
    %857 = vmatprep.subr.mxu0 0.0
    %858 = vmatpush2.msra.mxu0 %v332
    %859 = vmatprep.subr.mxu0 0.0
    %860 = vmatpush2.msra.mxu0 %v331
    %861 = vmatprep.subr.mxu0 0.0
    %862 = vmatpush2.msra.mxu0 %v330
    %863 = vmatprep.subr.mxu0 0.0
    %864 = vmatpush2.msra.mxu0 %v329
    %865 = vmatprep.mubr.f32.mxu0 %v730
    %866 = vmatmul.mubr.f32.gmra.mxu0 %v729
    %v867 = vpop.f32.mrf.mxu0
    %v868 = vadd.f32 %v798, %v867
    %v869 = vpop.f32.mrf.mxu0
    %870 = vdwg.mxu0
    %v871 = vmax.f32 %v868, 0.0
    %vm872 = vcmask 261120
    %v874 = vsel %vm872, %v871, 0
    %876 = vmatprep.subr.mxu0 0.0
    %877 = vmatpush1.msra.mxu0 0.0
    %878 = vmatprep.subr.mxu0 0.0
    %879 = vmatpush1.msra.mxu0 0.0
    %880 = vmatprep.subr.mxu0 0.0
    %881 = vmatpush1.msra.mxu0 0.0
    %882 = vmatprep.subr.mxu0 0.0
    %883 = vmatpush1.msra.mxu0 0.0
    %884 = vmatprep.subr.mxu0 0.0
    %885 = vmatpush1.msra.mxu0 0.0
    %886 = vmatprep.subr.mxu0 0.0
    %887 = vmatpush1.msra.mxu0 0.0
    %888 = vmatprep.subr.mxu0 0.0
    %889 = vmatpush1.msra.mxu0 0.0
    %890 = vmatprep.subr.mxu0 0.0
    %891 = vmatpush1.msra.mxu0 0.0
    %892 = vmatprep.subr.mxu0 0.0
    %893 = vmatpush1.msra.mxu0 0.0
    %894 = vmatprep.subr.mxu0 0.0
    %895 = vmatpush1.msra.mxu0 0.0
    %896 = vmatprep.subr.mxu0 0.0
    %897 = vmatpush1.msra.mxu0 0.0
    %898 = vmatprep.subr.mxu0 0.0
    %899 = vmatpush1.msra.mxu0 0.0
    %900 = vmatprep.subr.mxu0 0.0
    %901 = vmatpush1.msra.mxu0 %v349
    %902 = vmatprep.subr.mxu0 0.0
    %903 = vmatpush1.msra.mxu0 %v348
    %904 = vmatprep.subr.mxu0 0.0
    %905 = vmatpush1.msra.mxu0 %v347
    %906 = vmatprep.subr.mxu0 0.0
    %907 = vmatpush1.msra.mxu0 %v346
    %908 = vmatprep.subr.mxu0 0.0
    %909 = vmatpush2.msra.mxu0 0.0
    %910 = vmatprep.subr.mxu0 0.0
    %911 = vmatpush2.msra.mxu0 0.0
    %912 = vmatprep.subr.mxu0 0.0
    %913 = vmatpush2.msra.mxu0 0.0
    %914 = vmatprep.subr.mxu0 0.0
    %915 = vmatpush2.msra.mxu0 0.0
    %916 = vmatprep.subr.mxu0 0.0
    %917 = vmatpush2.msra.mxu0 0.0
    %918 = vmatprep.subr.mxu0 0.0
    %919 = vmatpush2.msra.mxu0 0.0
    %920 = vmatprep.subr.mxu0 0.0
    %921 = vmatpush2.msra.mxu0 0.0
    %922 = vmatprep.subr.mxu0 0.0
    %923 = vmatpush2.msra.mxu0 0.0
    %924 = vmatprep.subr.mxu0 0.0
    %925 = vmatpush2.msra.mxu0 0.0
    %926 = vmatprep.subr.mxu0 0.0
    %927 = vmatpush2.msra.mxu0 0.0
    %928 = vmatprep.subr.mxu0 0.0
    %929 = vmatpush2.msra.mxu0 0.0
    %930 = vmatprep.subr.mxu0 0.0
    %931 = vmatpush2.msra.mxu0 0.0
    %932 = vmatprep.subr.mxu0 0.0
    %933 = vmatpush2.msra.mxu0 0.0
    %934 = vmatprep.subr.mxu0 0.0
    %935 = vmatpush2.msra.mxu0 0.0
    %936 = vmatprep.subr.mxu0 0.0
    %937 = vmatpush2.msra.mxu0 0.0
    %938 = vmatprep.subr.mxu0 0.0
    %939 = vmatpush2.msra.mxu0 0.0
    %940 = vmatprep.mubr.f32.mxu0 0.0
    %941 = vmatmul.mubr.f32.gmra.mxu0 %v874
    %v942 = vpop.f32.mrf.mxu0
    %v943 = vadd.f32 %v350, %v942
    %v944 = vpop.f32.mrf.mxu0
    %945 = vdwg.mxu0
    %v946 = vmax.f32 %v943, 0.0
    %947 = vmatprep.subr.mxu0 0.0
    %948 = vmatpush1.msra.mxu0 %v366
    %949 = vmatprep.subr.mxu0 0.0
    %950 = vmatpush1.msra.mxu0 %v365
    %951 = vmatprep.subr.mxu0 0.0
    %952 = vmatpush1.msra.mxu0 %v364
    %953 = vmatprep.subr.mxu0 0.0
    %954 = vmatpush1.msra.mxu0 %v363
    %955 = vmatprep.subr.mxu0 0.0
    %956 = vmatpush1.msra.mxu0 %v362
    %957 = vmatprep.subr.mxu0 0.0
    %958 = vmatpush1.msra.mxu0 %v361
    %959 = vmatprep.subr.mxu0 0.0
    %960 = vmatpush1.msra.mxu0 %v360
    %961 = vmatprep.subr.mxu0 0.0
    %962 = vmatpush1.msra.mxu0 %v359
    %963 = vmatprep.subr.mxu0 0.0
    %964 = vmatpush1.msra.mxu0 %v358
    %965 = vmatprep.subr.mxu0 0.0
    %966 = vmatpush1.msra.mxu0 %v357
    %967 = vmatprep.subr.mxu0 0.0
    %968 = vmatpush1.msra.mxu0 %v356
    %969 = vmatprep.subr.mxu0 0.0
    %970 = vmatpush1.msra.mxu0 %v355
    %971 = vmatprep.subr.mxu0 0.0
    %972 = vmatpush1.msra.mxu0 %v354
    %973 = vmatprep.subr.mxu0 0.0
    %974 = vmatpush1.msra.mxu0 %v353
    %975 = vmatprep.subr.mxu0 0.0
    %976 = vmatpush1.msra.mxu0 %v352
    %977 = vmatprep.subr.mxu0 0.0
    %978 = vmatpush1.msra.mxu0 %v351
    %979 = vmatprep.subr.mxu0 0.0
    %980 = vmatpush2.msra.mxu0 0.0
    %981 = vmatprep.subr.mxu0 0.0
    %982 = vmatpush2.msra.mxu0 0.0
    %983 = vmatprep.subr.mxu0 0.0
    %984 = vmatpush2.msra.mxu0 0.0
    %985 = vmatprep.subr.mxu0 0.0
    %986 = vmatpush2.msra.mxu0 0.0
    %987 = vmatprep.subr.mxu0 0.0
    %988 = vmatpush2.msra.mxu0 0.0
    %989 = vmatprep.subr.mxu0 0.0
    %990 = vmatpush2.msra.mxu0 0.0
    %991 = vmatprep.subr.mxu0 0.0
    %992 = vmatpush2.msra.mxu0 0.0
    %993 = vmatprep.subr.mxu0 0.0
    %994 = vmatpush2.msra.mxu0 0.0
    %995 = vmatprep.subr.mxu0 0.0
    %996 = vmatpush2.msra.mxu0 0.0
    %997 = vmatprep.subr.mxu0 0.0
    %998 = vmatpush2.msra.mxu0 0.0
    %999 = vmatprep.subr.mxu0 0.0
    %1000 = vmatpush2.msra.mxu0 0.0
    %1001 = vmatprep.subr.mxu0 0.0
    %1002 = vmatpush2.msra.mxu0 0.0
    %1003 = vmatprep.subr.mxu0 0.0
    %1004 = vmatpush2.msra.mxu0 0.0
    %1005 = vmatprep.subr.mxu0 0.0
    %1006 = vmatpush2.msra.mxu0 0.0
    %1007 = vmatprep.subr.mxu0 0.0
    %1008 = vmatpush2.msra.mxu0 0.0
    %1009 = vmatprep.subr.mxu0 0.0
    %1010 = vmatpush2.msra.mxu0 0.0
    %1011 = vmatprep.mubr.f32.mxu0 0.0
    %1012 = vmatmul.mubr.f32.gmra.mxu0 %v946
    %v1013 = vpop.f32.mrf.mxu0
    %v1014 = vadd.f32 %v367, %v1013
    %v1015 = vpop.f32.mrf.mxu0
    %1016 = vdwg.mxu0
    %v1017 = vmax.f32 %v1014, 0.0
    %1018 = vmatprep.subr.mxu0 0.0
    %1019 = vmatpush1.msra.mxu0 %v383
    %1020 = vmatprep.subr.mxu0 0.0
    %1021 = vmatpush1.msra.mxu0 %v382
    %1022 = vmatprep.subr.mxu0 0.0
    %1023 = vmatpush1.msra.mxu0 %v381
    %1024 = vmatprep.subr.mxu0 0.0
    %1025 = vmatpush1.msra.mxu0 %v380
    %1026 = vmatprep.subr.mxu0 0.0
    %1027 = vmatpush1.msra.mxu0 %v379
    %1028 = vmatprep.subr.mxu0 0.0
    %1029 = vmatpush1.msra.mxu0 %v378
    %1030 = vmatprep.subr.mxu0 0.0
    %1031 = vmatpush1.msra.mxu0 %v377
    %1032 = vmatprep.subr.mxu0 0.0
    %1033 = vmatpush1.msra.mxu0 %v376
    %1034 = vmatprep.subr.mxu0 0.0
    %1035 = vmatpush1.msra.mxu0 %v375
    %1036 = vmatprep.subr.mxu0 0.0
    %1037 = vmatpush1.msra.mxu0 %v374
    %1038 = vmatprep.subr.mxu0 0.0
    %1039 = vmatpush1.msra.mxu0 %v373
    %1040 = vmatprep.subr.mxu0 0.0
    %1041 = vmatpush1.msra.mxu0 %v372
    %1042 = vmatprep.subr.mxu0 0.0
    %1043 = vmatpush1.msra.mxu0 %v371
    %1044 = vmatprep.subr.mxu0 0.0
    %1045 = vmatpush1.msra.mxu0 %v370
    %1046 = vmatprep.subr.mxu0 0.0
    %1047 = vmatpush1.msra.mxu0 %v369
    %1048 = vmatprep.subr.mxu0 0.0
    %1049 = vmatpush1.msra.mxu0 %v368
    %1050 = vmatprep.subr.mxu0 0.0
    %1051 = vmatpush2.msra.mxu0 0.0
    %1052 = vmatprep.subr.mxu0 0.0
    %1053 = vmatpush2.msra.mxu0 0.0
    %1054 = vmatprep.subr.mxu0 0.0
    %1055 = vmatpush2.msra.mxu0 0.0
    %1056 = vmatprep.subr.mxu0 0.0
    %1057 = vmatpush2.msra.mxu0 0.0
    %1058 = vmatprep.subr.mxu0 0.0
    %1059 = vmatpush2.msra.mxu0 0.0
    %1060 = vmatprep.subr.mxu0 0.0
    %1061 = vmatpush2.msra.mxu0 0.0
    %1062 = vmatprep.subr.mxu0 0.0
    %1063 = vmatpush2.msra.mxu0 0.0
    %1064 = vmatprep.subr.mxu0 0.0
    %1065 = vmatpush2.msra.mxu0 0.0
    %1066 = vmatprep.subr.mxu0 0.0
    %1067 = vmatpush2.msra.mxu0 0.0
    %1068 = vmatprep.subr.mxu0 0.0
    %1069 = vmatpush2.msra.mxu0 0.0
    %1070 = vmatprep.subr.mxu0 0.0
    %1071 = vmatpush2.msra.mxu0 0.0
    %1072 = vmatprep.subr.mxu0 0.0
    %1073 = vmatpush2.msra.mxu0 0.0
    %1074 = vmatprep.subr.mxu0 0.0
    %1075 = vmatpush2.msra.mxu0 0.0
    %1076 = vmatprep.subr.mxu0 0.0
    %1077 = vmatpush2.msra.mxu0 0.0
    %1078 = vmatprep.subr.mxu0 0.0
    %1079 = vmatpush2.msra.mxu0 0.0
    %1080 = vmatprep.subr.mxu0 0.0
    %1081 = vmatpush2.msra.mxu0 0.0
    %1082 = vmatprep.mubr.f32.mxu0 0.0
    %1083 = vmatmul.mubr.f32.gmra.mxu0 %v1017
    %v1084 = vpop.f32.mrf.mxu0
    %v1085 = vadd.f32 %v384, %v1084
    %v1086 = vpop.f32.mrf.mxu0
    %1087 = vdwg.mxu0
    %1088 = vst [vmem:[#allocation5] sm:$0x3] %v1085
    // Predicated region
    $region14: #{actor_forward.1} parent=1 // pred_check
      _
    $region15: #{actor_forward.1} parent=1 // pred_check_branch
      %1090 = sbr.rel (0) target = $region17
    $region16: #{actor_forward.1} parent=1 // pred_region
      %s1092 = ssub.s32 32, 32
      %1093 = vsyncadd [#allocation4], %s1092
      %s1095 = sshll.u32 [#allocation5], 4
      %s1096 = int_to_ptr.vmem [resolvable:$true] %s1095
      %1098 = dma.vmem_to_hbm [thread:$0]  %s1096, 32, %s2, [#allocation4]
    $region17: #{actor_forward.1} parent=1 // pred_fallthru
      _
    // Predicated region
    $region18: #{actor_forward.1} parent=1 // pred_check
      _
    $region19: #{actor_forward.1} parent=1 // pred_check_branch
      %1100 = sbr.rel (0) target = $region21
    $region20: #{actor_forward.1} parent=1 // pred_region
      %1101 = dma.done [#allocation4], 32
    $region21: #{actor_forward.1} parent=1 // pred_fallthru
      _
    %1102 = vsyncpa [#allocation3], 1
    %1103 = vsyncpa [#allocation4], 1

</llo_original>
